<compile_context>
chip_gen: v7x
topology: tpu7x:2x2x1
jax: 0.10.0
libtpu: 0.0.40
codegen_flags: <defaults>
</compile_context>

<pallas_src>
from functools import partial

import jax
import jax.numpy as jnp
from jax.experimental import pallas as pl
from jax.experimental.pallas import tpu as pltpu


def _round_up(v, m):
    return (v + m - 1) // m * m


def _fused_clustering_kernel(x_ref, w_ref, b_ref, o_ref):
    # x_ref: (TB, D) bf16, w_ref: (D, TN) bf16, b_ref: (1, TN) f32,
    # o_ref: (TB, TN) f32.  f32 accumulation on the MXU, bias add in f32.
    acc = jnp.dot(x_ref[...], w_ref[...], preferred_element_type=jnp.float32)
    o_ref[...] = (acc + b_ref[...]).astype(o_ref.dtype)


def _vmem_capacity_bytes():
    try:
        return int(pltpu.get_tpu_info().vmem_capacity_bytes)
    except Exception:
        return 64 << 20  # conservative default: v7x per-TensorCore VMEM


def _select_tiling(B, D, Np):
    """Pick (TB, TN, weights_resident, vmem_limit_bytes) for this generation."""
    X_ELT, W_ELT, OUT_ELT = 2, 2, 4  # bf16 x / bf16 W / f32 out+bias
    cap = _vmem_capacity_bytes()
    budget = cap // 2  # leave headroom for compiler scratch / pipeline state

    # Column tiling: keep the fused W resident (single-buffered) when it fits
    # in ~half the budget; otherwise stream double-buffered column tiles.
    if D * Np * W_ELT <= budget // 2:
        TN, resident = Np, True
    else:
        TN = 512
        while TN > 128 and 2 * D * TN * W_ELT > budget // 2:
            TN -= 128
        TN, resident = min(TN, Np), False

    w_bufs = 1 if resident else 2
    w_bytes = w_bufs * (D * TN * W_ELT + TN * OUT_ELT)

    # Batch tiling: biggest 16-row-aligned tile whose double-buffered x and
    # output tiles fit the remaining budget (per-grid-step overhead ~0.35us,
    # so bigger tiles amortize better), capped at 2048 rows.
    per_row = 2 * D * X_ELT + 2 * TN * OUT_ELT
    TB = max((budget - w_bytes) // per_row, 16)
    TB = min(2048, (TB // 16) * 16)
    if TB >= B:
        TB = B  # block equal to the full batch dim is always layout-legal
    # Give v7x's two TensorCores >=2 "parallel" batch steps to split.
    if B >= 32 and pl.cdiv(B, TB) < 2:
        TB = max(16, _round_up(-(-B // 2), 16))

    need = 2 * TB * D * X_ELT + 2 * TB * TN * OUT_ELT + w_bytes
    vmem_limit = int(min(max(need * 3 // 2 + (2 << 20), 8 << 20),
                         int(cap * 0.6)))
    return TB, TN, resident, vmem_limit


@partial(jax.jit, static_argnames=("heads", "n_clusters", "single_buffer_wb"))
def _clustering_forward(x, w_p, b_p, *, heads, n_clusters, single_buffer_wb):
    """x: (B, D); w_p: (D, Np) bf16 fused+padded; b_p: (1, Np) f32 fused+padded.
    Returns (heads, B, n_clusters) float32 logits."""
    B, D = x.shape
    _, Np = w_p.shape
    N = heads * n_clusters

    # Matmul operands in bf16 (cast fuses with upstream producers under jit).
    x_bf = x.astype(jnp.bfloat16)

    TB, TN, resident, vmem_limit = _select_tiling(B, D, Np)
    nb = pl.cdiv(B, TB)
    nc = pl.cdiv(Np, TN)
    single_wb = single_buffer_wb and resident and nc == 1

    if single_wb:
        # Grid-invariant blocks: double-buffering buys nothing, halve their VMEM.
        w_spec = pl.BlockSpec((D, TN), lambda i, j: (0, j),
                              pipeline_mode=pl.Buffered(1))
        b_spec = pl.BlockSpec((1, TN), lambda i, j: (0, j),
                              pipeline_mode=pl.Buffered(1))
    else:
        w_spec = pl.BlockSpec((D, TN), lambda i, j: (0, j))
        b_spec = pl.BlockSpec((1, TN), lambda i, j: (0, j))

    out = pl.pallas_call(
        _fused_clustering_kernel,
        out_shape=jax.ShapeDtypeStruct((B, Np), jnp.float32),
        grid=(nb, nc),  # ragged last batch block is masked by Pallas (no x pad)
        in_specs=[
            pl.BlockSpec((TB, D), lambda i, j: (i, 0)),  # batch tile of x
            w_spec,                                      # fused weight columns
            b_spec,                                      # fused bias columns
        ],
        out_specs=pl.BlockSpec((TB, TN), lambda i, j: (i, j)),
        compiler_params=pltpu.CompilerParams(
            dimension_semantics=("parallel", "parallel"),
            vmem_limit_bytes=vmem_limit,
        ),
    )(x_bf, w_p, b_p)

    # Drop lane padding once, split into per-head logits with one reshape.
    logits = out[:, :N].reshape(B, heads, n_clusters)
    return jnp.transpose(logits, (1, 0, 2))


class ClusteringHeadPallas:
    """Mirror of the PyTorch ClusteringHead: list of Linear(in_dim, n_clusters)."""

    def __init__(self, in_dim=512, n_clusters=10, heads=1, key=None):
        if key is None:
            key = jax.random.PRNGKey(0)
        kw, kb = jax.random.split(key)
        bound = 1.0 / (in_dim ** 0.5)
        # PyTorch stores Linear weight as (n_clusters, in_dim); keep the
        # transposed (in_dim, n_clusters) layout so the kernel computes x @ W.
        self.w_stack = jax.random.uniform(
            kw, (heads, in_dim, n_clusters), jnp.float32, minval=-bound, maxval=bound)
        self.b_stack = jax.random.uniform(
            kb, (heads, n_clusters), jnp.float32, minval=-bound, maxval=bound)
        self.heads, self.n_clusters, self.in_dim = heads, n_clusters, in_dim

        # --- Hoisted (cached) head fusion + lane padding + bf16 cast. ---
        N = heads * n_clusters
        Np = _round_up(N, 128)
        w_flat = jnp.transpose(self.w_stack, (1, 0, 2)).reshape(in_dim, N)
        b_flat = self.b_stack.reshape(1, N)
        self.w_p = jnp.pad(w_flat, ((0, 0), (0, Np - N))).astype(jnp.bfloat16)
        self.b_p = jnp.pad(b_flat, ((0, 0), (0, Np - N)))  # bias stays f32
        self._single_buffer_wb = True

    def __call__(self, x):
        try:
            fused = _clustering_forward(
                x, self.w_p, self.b_p,
                heads=self.heads, n_clusters=self.n_clusters,
                single_buffer_wb=self._single_buffer_wb)
        except Exception:
            # pl.Buffered(1) not supported on this JAX/libtpu: fall back to the
            # default double-buffered weight blocks and retry.
            self._single_buffer_wb = False
            fused = _clustering_forward(
                x, self.w_p, self.b_p,
                heads=self.heads, n_clusters=self.n_clusters,
                single_buffer_wb=False)
        # fused: (H, B, C) -> list of per-head (B, C) arrays (PyTorch interface).
        return [fused[h] for h in range(self.heads)]


if __name__ == "__main__":
    # Small shapes consistent with the module's forward: x is (batch, in_dim).
    B, IN_DIM, N_CLUSTERS, HEADS = 8, 32, 10, 2

    key = jax.random.PRNGKey(0)
    kx, kparams = jax.random.split(key)
    x = jax.random.normal(kx, (B, IN_DIM), jnp.float32)

    model = ClusteringHeadPallas(in_dim=IN_DIM, n_clusters=N_CLUSTERS,
                                 heads=HEADS, key=kparams)
    outs = model(x)
    outs = [jax.block_until_ready(o) for o in outs]

    # Correctness check against the plain-JAX reference of the PyTorch semantics.
    # bf16 matmul operands (f32 accumulation) => relaxed tolerance vs f32 ref.
    refs = [x @ model.w_stack[h] + model.b_stack[h] for h in range(HEADS)]
    for o, r in zip(outs, refs):
        assert o.shape == (B, N_CLUSTERS)
        assert jnp.allclose(o, r, atol=2e-2, rtol=2e-2), \
            float(jnp.max(jnp.abs(o - r)))

    print("KERNEL_OK")
</pallas_src>

<mosaic_0001>
module attributes {stable_mosaic.version = 11 : i64} {
  func.func @_fused_clustering_kernel(%arg0: i32, %arg1: i32, %arg2: memref<8x32xbf16, #tpu.memory_space<vmem>>, %arg3: memref<32x128xbf16, #tpu.memory_space<vmem>>, %arg4: memref<1x128xf32, #tpu.memory_space<vmem>>, %arg5: memref<8x128xf32, #tpu.memory_space<vmem>>) attributes {dimension_semantics = [#tpu.dimension_semantics<parallel>, #tpu.dimension_semantics<parallel>], iteration_bounds = array<i64: 1, 1>, scalar_prefetch = 0 : i64, scratch_operands = 0 : i64, tpu.core_type = #tpu.core_type<tc>, window_params = [{transform_indices = @transform_0, window_bounds = array<i64: 8, 32>}, {pipeline_mode = #tpu.pipeline_mode<synchronous>, transform_indices = @transform_1, window_bounds = array<i64: 32, 128>}, {pipeline_mode = #tpu.pipeline_mode<synchronous>, transform_indices = @transform_2, window_bounds = array<i64: 1, 128>}, {transform_indices = @transform_3, window_bounds = array<i64: 8, 128>}]} {
    %c0 = arith.constant 0 : index
    %c0_0 = arith.constant 0 : index
    %0 = vector.load %arg2[%c0, %c0_0] : memref<8x32xbf16, #tpu.memory_space<vmem>>, vector<8x32xbf16>
    %c0_1 = arith.constant 0 : index
    %c0_2 = arith.constant 0 : index
    %1 = vector.load %arg3[%c0_1, %c0_2] : memref<32x128xbf16, #tpu.memory_space<vmem>>, vector<32x128xbf16>
    %cst = arith.constant dense<0.000000e+00> : vector<8x128xf32>
    %2 = tpu.matmul %0, %1, %cst {dimension_numbers = #tpu.dot_dimension_numbers<[1], [0], [0], [1], [0, 0, 1, 1], [], []>} : vector<8x32xbf16>, vector<32x128xbf16>, vector<8x128xf32> -> vector<8x128xf32>
    %c0_3 = arith.constant 0 : index
    %c0_4 = arith.constant 0 : index
    %3 = vector.load %arg4[%c0_3, %c0_4] : memref<1x128xf32, #tpu.memory_space<vmem>>, vector<1x128xf32>
    %4 = vector.broadcast %3 : vector<1x128xf32> to vector<8x128xf32>
    %5 = arith.addf %2, %4 : vector<8x128xf32>
    %c0_5 = arith.constant 0 : index
    %c0_6 = arith.constant 0 : index
    %6 = vector.load %arg5[%c0_5, %c0_6] : memref<8x128xf32, #tpu.memory_space<vmem>>, vector<8x128xf32>
    tpu.vector_store %arg5[%c0_5, %c0_6], %5 {strides = array<i32>} : memref<8x128xf32, #tpu.memory_space<vmem>>, vector<8x128xf32>,
    return
  }
  func.func @transform_0(%arg0: i32, %arg1: i32) -> (i32, i32) {
    %c0_i32 = arith.constant 0 : i32
    %c0_i32_0 = arith.constant 0 : i32
    return %arg0, %c0_i32 : i32, i32
  }
  func.func @transform_1(%arg0: i32, %arg1: i32) -> (i32, i32) {
    %c0_i32 = arith.constant 0 : i32
    %c0_i32_0 = arith.constant 0 : i32
    return %c0_i32, %arg1 : i32, i32
  }
  func.func @transform_2(%arg0: i32, %arg1: i32) -> (i32, i32) {
    %c0_i32 = arith.constant 0 : i32
    %c0_i32_0 = arith.constant 0 : i32
    return %c0_i32, %arg1 : i32, i32
  }
  func.func @transform_3(%arg0: i32, %arg1: i32) -> (i32, i32) {
    %c0_i32 = arith.constant 0 : i32
    return %arg0, %arg1 : i32, i32
  }
}

module attributes {stable_mosaic.version = 11 : i64} {
  func.func @_fused_clustering_kernel(%arg0: i32, %arg1: i32, %arg2: memref<8x32xbf16, #tpu.memory_space<vmem>>, %arg3: memref<32x128xbf16, #tpu.memory_space<vmem>>, %arg4: memref<1x128xf32, #tpu.memory_space<vmem>>, %arg5: memref<8x128xf32, #tpu.memory_space<vmem>>) attributes {dimension_semantics = [#tpu.dimension_semantics<parallel>, #tpu.dimension_semantics<parallel>], iteration_bounds = array<i64: 1, 1>, scalar_prefetch = 0 : i64, scratch_operands = 0 : i64, tpu.core_type = #tpu.core_type<tc>, window_params = [{transform_indices = @transform_0, window_bounds = array<i64: 8, 32>}, {transform_indices = @transform_1, window_bounds = array<i64: 32, 128>}, {transform_indices = @transform_2, window_bounds = array<i64: 1, 128>}, {transform_indices = @transform_3, window_bounds = array<i64: 8, 128>}]} {
    %c0 = arith.constant 0 : index
    %c0_0 = arith.constant 0 : index
    %0 = vector.load %arg2[%c0, %c0_0] : memref<8x32xbf16, #tpu.memory_space<vmem>>, vector<8x32xbf16>
    %c0_1 = arith.constant 0 : index
    %c0_2 = arith.constant 0 : index
    %1 = vector.load %arg3[%c0_1, %c0_2] : memref<32x128xbf16, #tpu.memory_space<vmem>>, vector<32x128xbf16>
    %cst = arith.constant dense<0.000000e+00> : vector<8x128xf32>
    %2 = tpu.matmul %0, %1, %cst {dimension_numbers = #tpu.dot_dimension_numbers<[1], [0], [0], [1], [0, 0, 1, 1], [], []>} : vector<8x32xbf16>, vector<32x128xbf16>, vector<8x128xf32> -> vector<8x128xf32>
    %c0_3 = arith.constant 0 : index
    %c0_4 = arith.constant 0 : index
    %3 = vector.load %arg4[%c0_3, %c0_4] : memref<1x128xf32, #tpu.memory_space<vmem>>, vector<1x128xf32>
    %4 = vector.broadcast %3 : vector<1x128xf32> to vector<8x128xf32>
    %5 = arith.addf %2, %4 : vector<8x128xf32>
    %c0_5 = arith.constant 0 : index
    %c0_6 = arith.constant 0 : index
    %6 = vector.load %arg5[%c0_5, %c0_6] : memref<8x128xf32, #tpu.memory_space<vmem>>, vector<8x128xf32>
    tpu.vector_store %arg5[%c0_5, %c0_6], %5 {strides = array<i32>} : memref<8x128xf32, #tpu.memory_space<vmem>>, vector<8x128xf32>,
    return
  }
  func.func @transform_0(%arg0: i32, %arg1: i32) -> (i32, i32) {
    %c0_i32 = arith.constant 0 : i32
    %c0_i32_0 = arith.constant 0 : i32
    return %arg0, %c0_i32 : i32, i32
  }
  func.func @transform_1(%arg0: i32, %arg1: i32) -> (i32, i32) {
    %c0_i32 = arith.constant 0 : i32
    %c0_i32_0 = arith.constant 0 : i32
    return %c0_i32, %arg1 : i32, i32
  }
  func.func @transform_2(%arg0: i32, %arg1: i32) -> (i32, i32) {
    %c0_i32 = arith.constant 0 : i32
    %c0_i32_0 = arith.constant 0 : i32
    return %c0_i32, %arg1 : i32, i32
  }
  func.func @transform_3(%arg0: i32, %arg1: i32) -> (i32, i32) {
    %c0_i32 = arith.constant 0 : i32
    return %arg0, %arg1 : i32, i32
  }
}

</mosaic_0001>

<llo_original>
// kernel: _clustering_forward.1
$region0: #{_clustering_forward.1}
  #allocation0 [shape = 'u32[]', space=smem, size = 0x4, offset = 0x4, fixed_abs, tag = 'smem constant byte address 0x4 - core index']
  #allocation1 [shape = 'u32[144,128]{1,0:T(1,128)}', space=vmem, size = 0x12000, scoped, tag = 'internal scratch']
  %s0 = inlined_call_operand.vmem [shape: bf16[8,32], index: 0, kind: input, shape index: {}]
  %s1 = inlined_call_operand.hbm [shape: bf16[32,128], index: 1, kind: input, shape index: {}]
  %s2 = inlined_call_operand.vmem [shape: f32[1,128], index: 2, kind: input, shape index: {}]
  %s3 = inlined_call_operand.vmem [shape: f32[8,128], index: 3, kind: output, shape index: {}]
  %s4 = sld [smem:[#allocation0]]
  $region26: #{_clustering_forward.1} parent=0
    _
  %s6 = ssub.s32 1, %s4
  %s7 = scalar_select 0, %s6, %s4
  $region1: #{_clustering_forward.1} parent=0
    #allocation2 [shape = 'u8[8192]{0}', space=vmem, size = 0x2000, scoped, tag = 'input window, operand 1, single buffered']
    #allocation3 [shape = 's32[1]{0}', space=sflag, size = 0x4, scoped, tag = 'scoped memory for _clustering_forward.1']
    %8 = vsyncpa [#allocation3], 0
    // Predicated region
    $region2: #{_clustering_forward.1} parent=1 // pred_check
      _
    $region3: #{_clustering_forward.1} parent=1 // pred_check_branch
      %10 = sbr.rel (0) target = $region5
    $region4: #{_clustering_forward.1} parent=1 // pred_region
      _
    $region5: #{_clustering_forward.1} parent=1 // pred_fallthru
      _
    // Predicated region
    $region6: #{_clustering_forward.1} parent=1 // pred_check
      _
    $region7: #{_clustering_forward.1} parent=1 // pred_check_branch
      %12 = sbr.rel (0) target = $region9
    $region8: #{_clustering_forward.1} parent=1 // pred_region
      %s14 = ssub.s32 256, 256
      %15 = vsyncadd [#allocation3], %s14
      %s16 = sshll.u32 [#allocation2], 4
      %s17 = int_to_ptr.vmem [resolvable:$true] %s16
      %22 = dma.hbm_to_vmem [thread:$0]  %s1, 256, %s17, [#allocation3], 64, 64, 4
    $region9: #{_clustering_forward.1} parent=1 // pred_fallthru
      _
    // Predicated region
    $region10: #{_clustering_forward.1} parent=1 // pred_check
      _
    $region11: #{_clustering_forward.1} parent=1 // pred_check_branch
      %24 = sbr.rel (0) target = $region13
    $region12: #{_clustering_forward.1} parent=1 // pred_region
      _
    $region13: #{_clustering_forward.1} parent=1 // pred_fallthru
      _
    // Predicated region
    $region14: #{_clustering_forward.1} parent=1 // pred_check
      _
    $region15: #{_clustering_forward.1} parent=1 // pred_check_branch
      %26 = sbr.rel (0) target = $region17
    $region16: #{_clustering_forward.1} parent=1 // pred_region
      %27 = dma.done [#allocation3], 256
    $region17: #{_clustering_forward.1} parent=1 // pred_fallthru
      _
    %v29 = vld [vmem:[%s0] sm:$0xf]
    %v30 = vld [vmem:[#allocation2] sm:$0xf]
    %v31 = vld [vmem:[#allocation2 + $0x4] sm:$0xf]
    %v32 = vld [vmem:[#allocation2 + $0x8] sm:$0xf]
    %v33 = vld [vmem:[#allocation2 + $0xc] sm:$0xf]
    %v34 = vld [vmem:[%s2] sm:$0x1]
    %v36 = vlaneseq
    %v37 = vshrl.u32 %v36, 7
    %v38 = vsub.s32 0, %v37
    %v39 = vrot.slane %v34, %v38
    %v45 = vunpack.c.l.b16 %v30
    %v46 = vunpack.c.l.b16 %v31
    %v47 = vunpack.c.l.b16 %v32
    %v48 = vunpack.c.l.b16 %v33
    %v49 = vpack.c.b16 %v46, %v45
    %v50 = vpack.c.b16 %v48, %v47
    %vm53 = vcmask 261120
    %v55 = vsel %vm53, %v29, 0
    %57 = vmatprep.subr.bf16.mxu0 0
    %58 = vmatpush1.bf16.msra.mxu0 %v49
    %59 = vmatprep.subr.bf16.mxu0 0
    %60 = vmatpush1.bf16.msra.mxu0 %v50
    %61 = vmatprep.subr.bf16.mxu0 0
    %62 = vmatpush1.bf16.msra.mxu0 0
    %63 = vmatprep.subr.bf16.mxu0 0
    %64 = vmatpush1.bf16.msra.mxu0 0
    %65 = vmatprep.subr.bf16.mxu0 0
    %66 = vmatpush1.bf16.msra.mxu0 0
    %67 = vmatprep.subr.bf16.mxu0 0
    %68 = vmatpush1.bf16.msra.mxu0 0
    %69 = vmatprep.subr.bf16.mxu0 0
    %70 = vmatpush1.bf16.msra.mxu0 0
    %71 = vmatprep.subr.bf16.mxu0 0
    %72 = vmatpush1.bf16.msra.mxu0 0
    %73 = vmatprep.subr.bf16.mxu0 0
    %74 = vmatpush1.bf16.msra.mxu0 0
    %75 = vmatprep.subr.bf16.mxu0 0
    %76 = vmatpush1.bf16.msra.mxu0 0
    %77 = vmatprep.subr.bf16.mxu0 0
    %78 = vmatpush1.bf16.msra.mxu0 0
    %79 = vmatprep.subr.bf16.mxu0 0
    %80 = vmatpush1.bf16.msra.mxu0 0
    %81 = vmatprep.subr.bf16.mxu0 0
    %82 = vmatpush1.bf16.msra.mxu0 0
    %83 = vmatprep.subr.bf16.mxu0 0
    %84 = vmatpush1.bf16.msra.mxu0 0
    %85 = vmatprep.subr.bf16.mxu0 0
    %86 = vmatpush1.bf16.msra.mxu0 0
    %87 = vmatprep.subr.bf16.mxu0 0
    %88 = vmatpush1.bf16.msra.mxu0 0
    %89 = vmatprep.mubr.bf16.mxu0 0
    %90 = vmatmul.mubr.bf16.gmra.mrb[0].mxu0 %v55
    %v91 = vpop.f32.mrb[0].mxu0
    %v92 = vadd.f32 %v39, %v91
    %v93 = vpop.f32.mrb[0].mxu0
    %v94 = vpop.f32.mrb[0].mxu0
    %v95 = vpop.f32.mrb[0].mxu0
    %96 = vdwg.mxu0
    %97 = vst [vmem:[%s3] sm:$0xff] %v92
    // Predicated region
    $region18: #{_clustering_forward.1} parent=1 // pred_check
      _
    $region19: #{_clustering_forward.1} parent=1 // pred_check_branch
      %99 = sbr.rel (0) target = $region21
    $region20: #{_clustering_forward.1} parent=1 // pred_region
      _
    $region21: #{_clustering_forward.1} parent=1 // pred_fallthru
      _
    // Predicated region
    $region22: #{_clustering_forward.1} parent=1 // pred_check
      _
    $region23: #{_clustering_forward.1} parent=1 // pred_check_branch
      %101 = sbr.rel (0) target = $region25
    $region24: #{_clustering_forward.1} parent=1 // pred_region
      _
    $region25: #{_clustering_forward.1} parent=1 // pred_fallthru
      _
    %102 = vsyncpa [#allocation3], 1

// kernel: _clustering_forward.1
$region0: #{_clustering_forward.1}
  #allocation0 [shape = 'u32[]', space=smem, size = 0x4, offset = 0x4, fixed_abs, tag = 'smem constant byte address 0x4 - core index']
  #allocation1 [shape = 'u32[144,128]{1,0:T(1,128)}', space=vmem, size = 0x12000, scoped, tag = 'internal scratch']
  %s0 = inlined_call_operand.vmem [shape: bf16[8,32], index: 0, kind: input, shape index: {}]
  %s1 = inlined_call_operand.hbm [shape: bf16[32,128], index: 1, kind: input, shape index: {}]
  %s2 = inlined_call_operand.vmem [shape: f32[1,128], index: 2, kind: input, shape index: {}]
  %s3 = inlined_call_operand.vmem [shape: f32[8,128], index: 3, kind: output, shape index: {}]
  %s4 = sld [smem:[#allocation0]]
  $region26: #{_clustering_forward.1} parent=0
    _
  %s6 = ssub.s32 1, %s4
  %s7 = scalar_select 0, %s6, %s4
  $region1: #{_clustering_forward.1} parent=0
    #allocation2 [shape = 'u8[8192]{0}', space=vmem, size = 0x2000, scoped, tag = 'input window, operand 1, single buffered']
    #allocation3 [shape = 's32[1]{0}', space=sflag, size = 0x4, scoped, tag = 'scoped memory for _clustering_forward.1']
    %8 = vsyncpa [#allocation3], 0
    // Predicated region
    $region2: #{_clustering_forward.1} parent=1 // pred_check
      _
    $region3: #{_clustering_forward.1} parent=1 // pred_check_branch
      %10 = sbr.rel (0) target = $region5
    $region4: #{_clustering_forward.1} parent=1 // pred_region
      _
    $region5: #{_clustering_forward.1} parent=1 // pred_fallthru
      _
    // Predicated region
    $region6: #{_clustering_forward.1} parent=1 // pred_check
      _
    $region7: #{_clustering_forward.1} parent=1 // pred_check_branch
      %12 = sbr.rel (0) target = $region9
    $region8: #{_clustering_forward.1} parent=1 // pred_region
      %s14 = ssub.s32 256, 256
      %15 = vsyncadd [#allocation3], %s14
      %s16 = sshll.u32 [#allocation2], 4
      %s17 = int_to_ptr.vmem [resolvable:$true] %s16
      %22 = dma.hbm_to_vmem [thread:$0]  %s1, 256, %s17, [#allocation3], 64, 64, 4
    $region9: #{_clustering_forward.1} parent=1 // pred_fallthru
      _
    // Predicated region
    $region10: #{_clustering_forward.1} parent=1 // pred_check
      _
    $region11: #{_clustering_forward.1} parent=1 // pred_check_branch
      %24 = sbr.rel (0) target = $region13
    $region12: #{_clustering_forward.1} parent=1 // pred_region
      _
    $region13: #{_clustering_forward.1} parent=1 // pred_fallthru
      _
    // Predicated region
    $region14: #{_clustering_forward.1} parent=1 // pred_check
      _
    $region15: #{_clustering_forward.1} parent=1 // pred_check_branch
      %26 = sbr.rel (0) target = $region17
    $region16: #{_clustering_forward.1} parent=1 // pred_region
      %27 = dma.done [#allocation3], 256
    $region17: #{_clustering_forward.1} parent=1 // pred_fallthru
      _
    %v29 = vld [vmem:[%s0] sm:$0xf]
    %v30 = vld [vmem:[#allocation2] sm:$0xf]
    %v31 = vld [vmem:[#allocation2 + $0x4] sm:$0xf]
    %v32 = vld [vmem:[#allocation2 + $0x8] sm:$0xf]
    %v33 = vld [vmem:[#allocation2 + $0xc] sm:$0xf]
    %v34 = vld [vmem:[%s2] sm:$0x1]
    %v36 = vlaneseq
    %v37 = vshrl.u32 %v36, 7
    %v38 = vsub.s32 0, %v37
    %v39 = vrot.slane %v34, %v38
    %v45 = vunpack.c.l.b16 %v30
    %v46 = vunpack.c.l.b16 %v31
    %v47 = vunpack.c.l.b16 %v32
    %v48 = vunpack.c.l.b16 %v33
    %v49 = vpack.c.b16 %v46, %v45
    %v50 = vpack.c.b16 %v48, %v47
    %vm53 = vcmask 261120
    %v55 = vsel %vm53, %v29, 0
    %57 = vmatprep.subr.bf16.mxu0 0
    %58 = vmatpush1.bf16.msra.mxu0 %v49
    %59 = vmatprep.subr.bf16.mxu0 0
    %60 = vmatpush1.bf16.msra.mxu0 %v50
    %61 = vmatprep.subr.bf16.mxu0 0
    %62 = vmatpush1.bf16.msra.mxu0 0
    %63 = vmatprep.subr.bf16.mxu0 0
    %64 = vmatpush1.bf16.msra.mxu0 0
    %65 = vmatprep.subr.bf16.mxu0 0
    %66 = vmatpush1.bf16.msra.mxu0 0
    %67 = vmatprep.subr.bf16.mxu0 0
    %68 = vmatpush1.bf16.msra.mxu0 0
    %69 = vmatprep.subr.bf16.mxu0 0
    %70 = vmatpush1.bf16.msra.mxu0 0
    %71 = vmatprep.subr.bf16.mxu0 0
    %72 = vmatpush1.bf16.msra.mxu0 0
    %73 = vmatprep.subr.bf16.mxu0 0
    %74 = vmatpush1.bf16.msra.mxu0 0
    %75 = vmatprep.subr.bf16.mxu0 0
    %76 = vmatpush1.bf16.msra.mxu0 0
    %77 = vmatprep.subr.bf16.mxu0 0
    %78 = vmatpush1.bf16.msra.mxu0 0
    %79 = vmatprep.subr.bf16.mxu0 0
    %80 = vmatpush1.bf16.msra.mxu0 0
    %81 = vmatprep.subr.bf16.mxu0 0
    %82 = vmatpush1.bf16.msra.mxu0 0
    %83 = vmatprep.subr.bf16.mxu0 0
    %84 = vmatpush1.bf16.msra.mxu0 0
    %85 = vmatprep.subr.bf16.mxu0 0
    %86 = vmatpush1.bf16.msra.mxu0 0
    %87 = vmatprep.subr.bf16.mxu0 0
    %88 = vmatpush1.bf16.msra.mxu0 0
    %89 = vmatprep.mubr.bf16.mxu0 0
    %90 = vmatmul.mubr.bf16.gmra.mrb[0].mxu0 %v55
    %v91 = vpop.f32.mrb[0].mxu0
    %v92 = vadd.f32 %v39, %v91
    %v93 = vpop.f32.mrb[0].mxu0
    %v94 = vpop.f32.mrb[0].mxu0
    %v95 = vpop.f32.mrb[0].mxu0
    %96 = vdwg.mxu0
    %97 = vst [vmem:[%s3] sm:$0xff] %v92
    // Predicated region
    $region18: #{_clustering_forward.1} parent=1 // pred_check
      _
    $region19: #{_clustering_forward.1} parent=1 // pred_check_branch
      %99 = sbr.rel (0) target = $region21
    $region20: #{_clustering_forward.1} parent=1 // pred_region
      _
    $region21: #{_clustering_forward.1} parent=1 // pred_fallthru
      _
    // Predicated region
    $region22: #{_clustering_forward.1} parent=1 // pred_check
      _
    $region23: #{_clustering_forward.1} parent=1 // pred_check_branch
      %101 = sbr.rel (0) target = $region25
    $region24: #{_clustering_forward.1} parent=1 // pred_region
      _
    $region25: #{_clustering_forward.1} parent=1 // pred_fallthru
      _
    %102 = vsyncpa [#allocation3], 1

</llo_original>
